<compile_context>
chip_gen: v7x
topology: tpu7x:2x2x1
jax: 0.10.0
libtpu: 0.0.40
codegen_flags: <defaults>
</compile_context>

<pallas_src>
import functools

import jax
import jax.numpy as jnp
from jax.experimental import pallas as pl
from jax.experimental.pallas import tpu as pltpu


def _round_up(x, m):
    return ((x + m - 1) // m) * m


# ----------------------------- Pallas kernel --------------------------------
def _mlp_kernel(x_ref, w1_ref, b1_ref, w2_ref, b2_ref, o_ref, *, tanh_end):
    """One (copy, row-tile) grid step of  y = silu(x @ W1 + b1) @ W2 + b2."""
    # Feed the MXU at native dtype (bf16 stays bf16); accumulate in f32.
    h = jnp.dot(x_ref[...], w1_ref[...], preferred_element_type=jnp.float32)
    h = h + b1_ref[...].astype(jnp.float32)
    h = h * jax.nn.sigmoid(h)                    # SiLU in f32 (EUP)
    h = h.astype(w2_ref.dtype)                   # back to native MXU feed dtype
    y = jnp.dot(h, w2_ref[...], preferred_element_type=jnp.float32)
    y = y + b2_ref[...].astype(jnp.float32)
    if tanh_end:
        y = jnp.tanh(y)
    # NOTE: d_out=10 < 128 lanes -> masked vst; padding to 128 lanes trades
    # 12.8x writeback bytes for unmasked stores and only wins if store-bound.
    o_ref[...] = y.astype(o_ref.dtype)


def _pick_row_tile(n, target=512):
    """Row tile: large (>=256-multiple) for MXU fill / low per-step overhead,
    clamped for small N, and split so the grid keeps >=2 steps (v7x dual TC)."""
    n8 = _round_up(max(n, 8), 8)
    rt = min(target, n8)
    if rt == n8 and n8 > 256:          # a single tile would cover everything
        rt = _round_up(pl.cdiv(n8, 2), 8)
    return rt


def _mlp_forward(x3d, w1, b1, w2, b2, *, tanh_end=False, row_tile=512,
                 out_dtype=None):
    """x3d: (C, N, D_in); params stacked on the leading copy axis C.
    Returns (C, N, D_out). One pallas_call over grid (C, N/row_tile)."""
    c, n, d_in = x3d.shape
    width = w1.shape[-1]
    d_out = w2.shape[-1]
    if out_dtype is None:
        out_dtype = jnp.result_type(x3d.dtype, w2.dtype)

    rt = _pick_row_tile(n, row_tile)
    grid = (c, pl.cdiv(n, rt))          # ragged last row block masked by Pallas

    out = pl.pallas_call(
        functools.partial(_mlp_kernel, tanh_end=tanh_end),
        out_shape=jax.ShapeDtypeStruct((c, n, d_out), out_dtype),
        grid_spec=pltpu.PrefetchScalarGridSpec(
            num_scalar_prefetch=0,
            grid=grid,
            in_specs=[
                # x row tile for copy ci (copy dim squeezed out of the kernel ref)
                pl.BlockSpec((None, rt, d_in), lambda ci, ri: (ci, ri, 0)),
                # per-copy weights/biases, resident across the inner row loop
                pl.BlockSpec((None, d_in, width), lambda ci, ri: (ci, 0, 0)),
                pl.BlockSpec((None, 1, width), lambda ci, ri: (ci, 0, 0)),
                pl.BlockSpec((None, width, d_out), lambda ci, ri: (ci, 0, 0)),
                pl.BlockSpec((None, 1, d_out), lambda ci, ri: (ci, 0, 0)),
            ],
            out_specs=pl.BlockSpec((None, rt, d_out), lambda ci, ri: (ci, ri, 0)),
        ),
        compiler_params=pltpu.CompilerParams(
            dimension_semantics=("parallel", "parallel")),
    )(x3d, w1, b1, w2, b2)
    return out


# ------------------------ ProprioTokenizer wrapper ---------------------------
class ProprioTokenizerPallas:
    """JAX/Pallas equivalent of ProprioTokenizer.forward (MLP path)."""

    def __init__(self, input_dim=10, output_dim=10, widths=(512,),
                 tanh_end=False, num_of_copy=1, key=None, dtype=jnp.float32):
        assert len(widths) == 1, "single hidden width (matches default config)"
        # TODO(synk): widths > 1 adds Linear+LayerNorm+SiLU blocks (ln=True);
        # not needed for the module defaults and not implemented here.
        if key is None:
            key = jax.random.PRNGKey(0)
        self.num_of_copy = num_of_copy
        self.tanh_end = tanh_end
        width = widths[0]
        c = max(1, num_of_copy)
        keys = jax.random.split(key, 4 * c).reshape(c, 4, 2)
        s1 = 1.0 / float(input_dim) ** 0.5
        s2 = 1.0 / float(width) ** 0.5
        # Deterministic init, roughly matching nn.Linear's scale; stacked on a
        # leading copy axis so all copies run in ONE pallas_call.
        self.w1 = jnp.stack([jax.random.uniform(keys[i, 0], (input_dim, width),
                                                dtype, -s1, s1) for i in range(c)])
        self.b1 = jnp.stack([jax.random.uniform(keys[i, 1], (1, width),
                                                dtype, -s1, s1) for i in range(c)])
        self.w2 = jnp.stack([jax.random.uniform(keys[i, 2], (width, output_dim),
                                                dtype, -s2, s2) for i in range(c)])
        self.b2 = jnp.stack([jax.random.uniform(keys[i, 3], (1, output_dim),
                                                dtype, -s2, s2) for i in range(c)])

    def __call__(self, x):
        d_in = x.shape[-1]
        if self.num_of_copy > 1:
            # x: (B, C, ..., D_in); copy c goes through net c; stack on axis 1.
            iter_num = min(self.num_of_copy, x.shape[1])
            xc = jnp.moveaxis(x[:, :iter_num], 1, 0)          # (C, B, ..., D_in)
            lead = xc.shape[1:-1]
            x3d = xc.reshape(iter_num, -1, d_in)
            y3d = _mlp_forward(x3d, self.w1[:iter_num], self.b1[:iter_num],
                               self.w2[:iter_num], self.b2[:iter_num],
                               tanh_end=self.tanh_end)
            y = y3d.reshape((iter_num,) + lead + (y3d.shape[-1],))
            return jnp.moveaxis(y, 0, 1)                      # (B, C, ..., D_out)
        lead = x.shape[:-1]
        x3d = x.reshape(1, -1, d_in)
        y3d = _mlp_forward(x3d, self.w1, self.b1, self.w2, self.b2,
                           tanh_end=self.tanh_end)
        return y3d.reshape(lead + (y3d.shape[-1],))


# ------------------------------- reference -----------------------------------
def _reference(x, w1, b1, w2, b2, tanh_end=False):
    h = x.astype(jnp.float32) @ w1.astype(jnp.float32) + b1.astype(jnp.float32)
    h = h * jax.nn.sigmoid(h)
    y = h @ w2.astype(jnp.float32) + b2.astype(jnp.float32)
    if tanh_end:
        y = jnp.tanh(y)
    return y


if __name__ == "__main__":
    key = jax.random.PRNGKey(0)
    k_x, k_p, k_x2, k_p2 = jax.random.split(key, 4)

    # Small shapes consistent with the module: proprio features (B, T, input_dim)
    B, T, D_IN, D_OUT, WIDTH = 2, 8, 10, 10, 512
    x = jax.random.normal(k_x, (B, T, D_IN), dtype=jnp.float32)

    tok = ProprioTokenizerPallas(input_dim=D_IN, output_dim=D_OUT,
                                 widths=(WIDTH,), num_of_copy=1, key=k_p)
    y = jax.block_until_ready(tok(x))
    y_ref = _reference(x.reshape(-1, D_IN), tok.w1[0], tok.b1[0],
                       tok.w2[0], tok.b2[0]).reshape(B, T, D_OUT)
    assert y.shape == (B, T, D_OUT)
    assert jnp.allclose(y, y_ref, atol=1e-4, rtol=1e-4)

    # Multi-copy path: per-copy nets fused into one pallas_call (copy grid axis).
    C = 3
    x_mc = jax.random.normal(k_x2, (B, C, T, D_IN), dtype=jnp.float32)
    tok_mc = ProprioTokenizerPallas(input_dim=D_IN, output_dim=D_OUT,
                                    widths=(WIDTH,), num_of_copy=C, key=k_p2)
    y_mc = jax.block_until_ready(tok_mc(x_mc))
    assert y_mc.shape == (B, C, T, D_OUT)
    for c in range(C):
        yr = _reference(x_mc[:, c].reshape(-1, D_IN), tok_mc.w1[c], tok_mc.b1[c],
                        tok_mc.w2[c], tok_mc.b2[c]).reshape(B, T, D_OUT)
        assert jnp.allclose(y_mc[:, c], yr, atol=1e-4, rtol=1e-4)

    print("KERNEL_OK")
</pallas_src>

<mosaic_0001>
module attributes {stable_mosaic.version = 11 : i64} {
  func.func @_mlp_kernel(%arg0: i32, %arg1: i32, %arg2: memref<1x16x10xf32, #tpu.memory_space<vmem>>, %arg3: memref<1x10x512xf32, #tpu.memory_space<vmem>>, %arg4: memref<1x1x512xf32, #tpu.memory_space<vmem>>, %arg5: memref<1x512x10xf32, #tpu.memory_space<vmem>>, %arg6: memref<1x1x10xf32, #tpu.memory_space<vmem>>, %arg7: memref<1x16x10xf32, #tpu.memory_space<vmem>>) attributes {dimension_semantics = [#tpu.dimension_semantics<parallel>, #tpu.dimension_semantics<parallel>], iteration_bounds = array<i64: 1, 1>, scalar_prefetch = 0 : i64, scratch_operands = 0 : i64, tpu.core_type = #tpu.core_type<tc>, window_params = [{transform_indices = @transform_0, window_bounds = array<i64: 1, 16, 10>}, {transform_indices = @transform_1, window_bounds = array<i64: 1, 10, 512>}, {transform_indices = @transform_2, window_bounds = array<i64: 1, 1, 512>}, {transform_indices = @transform_3, window_bounds = array<i64: 1, 512, 10>}, {transform_indices = @transform_4, window_bounds = array<i64: 1, 1, 10>}, {transform_indices = @transform_5, window_bounds = array<i64: 1, 16, 10>}]} {
    %c0 = arith.constant 0 : index
    %c0_0 = arith.constant 0 : index
    %c0_1 = arith.constant 0 : index
    %0 = vector.load %arg2[%c0, %c0_0, %c0_1] : memref<1x16x10xf32, #tpu.memory_space<vmem>>, vector<1x16x10xf32>
    %1 = vector.shape_cast %0 : vector<1x16x10xf32> to vector<16x10xf32>
    %c0_2 = arith.constant 0 : index
    %c0_3 = arith.constant 0 : index
    %c0_4 = arith.constant 0 : index
    %2 = vector.load %arg3[%c0_2, %c0_3, %c0_4] : memref<1x10x512xf32, #tpu.memory_space<vmem>>, vector<1x10x512xf32>
    %3 = vector.shape_cast %2 : vector<1x10x512xf32> to vector<10x512xf32>
    %cst = arith.constant dense<0.000000e+00> : vector<16x512xf32>
    %4 = tpu.matmul %1, %3, %cst {dimension_numbers = #tpu.dot_dimension_numbers<[1], [0], [0], [1], [0, 0, 1, 1], [], []>} : vector<16x10xf32>, vector<10x512xf32>, vector<16x512xf32> -> vector<16x512xf32>
    %c0_5 = arith.constant 0 : index
    %c0_6 = arith.constant 0 : index
    %c0_7 = arith.constant 0 : index
    %5 = vector.load %arg4[%c0_5, %c0_6, %c0_7] : memref<1x1x512xf32, #tpu.memory_space<vmem>>, vector<1x1x512xf32>
    %6 = vector.shape_cast %5 : vector<1x1x512xf32> to vector<1x512xf32>
    %7 = vector.broadcast %6 : vector<1x512xf32> to vector<16x512xf32>
    %8 = arith.addf %4, %7 : vector<16x512xf32>
    %9 = arith.negf %8 : vector<16x512xf32>
    %10 = math.exp %9 : vector<16x512xf32>
    %cst_8 = arith.constant 1.000000e+00 : f32
    %11 = vector.broadcast %cst_8 : f32 to vector<16x512xf32>
    %12 = arith.addf %11, %10 : vector<16x512xf32>
    %13 = arith.divf %11, %12 : vector<16x512xf32>
    %14 = arith.mulf %8, %13 : vector<16x512xf32>
    %c0_9 = arith.constant 0 : index
    %c0_10 = arith.constant 0 : index
    %c0_11 = arith.constant 0 : index
    %15 = vector.load %arg5[%c0_9, %c0_10, %c0_11] : memref<1x512x10xf32, #tpu.memory_space<vmem>>, vector<1x512x10xf32>
    %16 = vector.shape_cast %15 : vector<1x512x10xf32> to vector<512x10xf32>
    %cst_12 = arith.constant dense<0.000000e+00> : vector<16x10xf32>
    %17 = tpu.matmul %14, %16, %cst_12 {dimension_numbers = #tpu.dot_dimension_numbers<[1], [0], [0], [1], [0, 0, 1, 1], [], []>} : vector<16x512xf32>, vector<512x10xf32>, vector<16x10xf32> -> vector<16x10xf32>
    %c0_13 = arith.constant 0 : index
    %c0_14 = arith.constant 0 : index
    %c0_15 = arith.constant 0 : index
    %18 = vector.load %arg6[%c0_13, %c0_14, %c0_15] : memref<1x1x10xf32, #tpu.memory_space<vmem>>, vector<1x1x10xf32>
    %19 = vector.shape_cast %18 : vector<1x1x10xf32> to vector<1x10xf32>
    %20 = vector.broadcast %19 : vector<1x10xf32> to vector<16x10xf32>
    %21 = arith.addf %17, %20 : vector<16x10xf32>
    %c0_16 = arith.constant 0 : index
    %c0_17 = arith.constant 0 : index
    %c0_18 = arith.constant 0 : index
    %22 = vector.load %arg7[%c0_16, %c0_17, %c0_18] : memref<1x16x10xf32, #tpu.memory_space<vmem>>, vector<1x16x10xf32>
    %23 = vector.shape_cast %22 : vector<1x16x10xf32> to vector<16x10xf32>
    %24 = vector.shape_cast %21 : vector<16x10xf32> to vector<1x16x10xf32>
    tpu.vector_store %arg7[%c0_16, %c0_17, %c0_18], %24 {strides = array<i32>} : memref<1x16x10xf32, #tpu.memory_space<vmem>>, vector<1x16x10xf32>,
    return
  }
  func.func @transform_0(%arg0: i32, %arg1: i32) -> (i32, i32, i32) {
    %c0_i32 = arith.constant 0 : i32
    %c0_i32_0 = arith.constant 0 : i32
    return %arg0, %arg1, %c0_i32 : i32, i32, i32
  }
  func.func @transform_1(%arg0: i32, %arg1: i32) -> (i32, i32, i32) {
    %c0_i32 = arith.constant 0 : i32
    %c0_i32_0 = arith.constant 0 : i32
    %c0_i32_1 = arith.constant 0 : i32
    return %arg0, %c0_i32, %c0_i32_0 : i32, i32, i32
  }
  func.func @transform_2(%arg0: i32, %arg1: i32) -> (i32, i32, i32) {
    %c0_i32 = arith.constant 0 : i32
    %c0_i32_0 = arith.constant 0 : i32
    %c0_i32_1 = arith.constant 0 : i32
    return %arg0, %c0_i32, %c0_i32_0 : i32, i32, i32
  }
  func.func @transform_3(%arg0: i32, %arg1: i32) -> (i32, i32, i32) {
    %c0_i32 = arith.constant 0 : i32
    %c0_i32_0 = arith.constant 0 : i32
    %c0_i32_1 = arith.constant 0 : i32
    return %arg0, %c0_i32, %c0_i32_0 : i32, i32, i32
  }
  func.func @transform_4(%arg0: i32, %arg1: i32) -> (i32, i32, i32) {
    %c0_i32 = arith.constant 0 : i32
    %c0_i32_0 = arith.constant 0 : i32
    %c0_i32_1 = arith.constant 0 : i32
    return %arg0, %c0_i32, %c0_i32_0 : i32, i32, i32
  }
  func.func @transform_5(%arg0: i32, %arg1: i32) -> (i32, i32, i32) {
    %c0_i32 = arith.constant 0 : i32
    %c0_i32_0 = arith.constant 0 : i32
    return %arg0, %arg1, %c0_i32 : i32, i32, i32
  }
}

</mosaic_0001>

<llo_original>
// kernel: tpu_custom_call.1
$region0: #{tpu_custom_call.1}
  #allocation0 [shape = 'u32[]', space=smem, size = 0x4, offset = 0x4, fixed_abs, tag = 'smem constant byte address 0x4 - core index']
  #allocation1 [shape = 'u32[144,128]{1,0:T(1,128)}', space=vmem, size = 0x12000, scoped, tag = 'internal scratch']
  %s0 = inlined_call_operand.vmem [shape: f32[1,16,10], index: 0, kind: input, shape index: {}]
  %s1 = inlined_call_operand.vmem [shape: f32[1,10,512], index: 1, kind: input, shape index: {}]
  %s2 = inlined_call_operand.vmem [shape: f32[1,1,512], index: 2, kind: input, shape index: {}]
  %s3 = inlined_call_operand.vmem [shape: f32[1,512,10], index: 3, kind: input, shape index: {}]
  %s4 = inlined_call_operand.vmem [shape: f32[1,1,10], index: 4, kind: input, shape index: {}]
  %s5 = inlined_call_operand.vmem [shape: f32[1,16,10], index: 5, kind: output, shape index: {}]
  %s6 = sld [smem:[#allocation0]]
  $region30: #{tpu_custom_call.1} parent=0
    _
  %s8 = ssub.s32 1, %s6
  %s9 = scalar_select 0, %s8, %s6
  // Predicated region
  $region2: #{tpu_custom_call.1} parent=0 // pred_check
    _
  $region3: #{tpu_custom_call.1} parent=0 // pred_check_branch
    %11 = sbr.rel (0) target = $region5
  $region4: #{tpu_custom_call.1} parent=0 // pred_region
    _
  $region5: #{tpu_custom_call.1} parent=0 // pred_fallthru
    _
  // Predicated region
  $region6: #{tpu_custom_call.1} parent=0 // pred_check
    _
  $region7: #{tpu_custom_call.1} parent=0 // pred_check_branch
    %13 = sbr.rel (0) target = $region9
  $region8: #{tpu_custom_call.1} parent=0 // pred_region
    _
  $region9: #{tpu_custom_call.1} parent=0 // pred_fallthru
    _
  // Predicated region
  $region10: #{tpu_custom_call.1} parent=0 // pred_check
    _
  $region11: #{tpu_custom_call.1} parent=0 // pred_check_branch
    %15 = sbr.rel (0) target = $region13
  $region12: #{tpu_custom_call.1} parent=0 // pred_region
    _
  $region13: #{tpu_custom_call.1} parent=0 // pred_fallthru
    _
  // Predicated region
  $region14: #{tpu_custom_call.1} parent=0 // pred_check
    _
  $region15: #{tpu_custom_call.1} parent=0 // pred_check_branch
    %17 = sbr.rel (0) target = $region17
  $region16: #{tpu_custom_call.1} parent=0 // pred_region
    _
  $region17: #{tpu_custom_call.1} parent=0 // pred_fallthru
    _
  // Predicated region
  $region18: #{tpu_custom_call.1} parent=0 // pred_check
    _
  $region19: #{tpu_custom_call.1} parent=0 // pred_check_branch
    %19 = sbr.rel (0) target = $region21
  $region20: #{tpu_custom_call.1} parent=0 // pred_region
    _
  $region21: #{tpu_custom_call.1} parent=0 // pred_fallthru
    _
  %v20 = vld [vmem:[%s0] sm:$0xff]
  %v21 = vld [vmem:[%s0 + $0x8] sm:$0xff]
  %v22 = vld [vmem:[%s1] sm:$0xff]
  %v23 = vld [vmem:[%s1 + $0x8] sm:$0xff]
  %v24 = vld [vmem:[%s1 + $0x10] sm:$0xff]
  %v25 = vld [vmem:[%s1 + $0x18] sm:$0xff]
  %v26 = vld [vmem:[%s1 + $0x20] sm:$0x3]
  %v27 = vld [vmem:[%s1 + $0x28] sm:$0x3]
  %v28 = vld [vmem:[%s1 + $0x30] sm:$0x3]
  %v29 = vld [vmem:[%s1 + $0x38] sm:$0x3]
  %v30 = vld [vmem:[%s2] sm:$0xf]
  %v32 = vlaneseq
  %v33 = vshrl.u32 %v32, 7
  %v34 = vsub.s32 0, %v33
  %v35 = vrot.slane %v30, %v34
  %v36 = vlaneseq
  %v37 = vshrl.u32 %v36, 7
  %v38 = vsub.s32 1, %v37
  %v39 = vrot.slane %v30, %v38
  %v40 = vlaneseq
  %v41 = vshrl.u32 %v40, 7
  %v42 = vsub.s32 2, %v41
  %v43 = vrot.slane %v30, %v42
  %v44 = vlaneseq
  %v45 = vshrl.u32 %v44, 7
  %v46 = vsub.s32 3, %v45
  %v47 = vrot.slane %v30, %v46
  %vm52 = vcmask 80896
  %v54 = vsel %vm52, %v20, 0
  %v57 = vsel %vm52, %v21, 0
  %vm59 = vcmask 1041408
  %v61 = vsel %vm59, %v26, 0
  %v64 = vsel %vm59, %v27, 0
  %v67 = vsel %vm59, %v28, 0
  %v70 = vsel %vm59, %v29, 0
  %72 = vmatprep.subr.mxu0 %v23
  %73 = vmatpush1.msra.mxu0 %v22
  %74 = vmatprep.subr.mxu0 %v64
  %75 = vmatpush1.msra.mxu0 %v61
  %76 = vmatprep.subr.mxu0 0.0
  %77 = vmatpush1.msra.mxu0 0.0
  %78 = vmatprep.subr.mxu0 0.0
  %79 = vmatpush1.msra.mxu0 0.0
  %80 = vmatprep.subr.mxu0 0.0
  %81 = vmatpush1.msra.mxu0 0.0
  %82 = vmatprep.subr.mxu0 0.0
  %83 = vmatpush1.msra.mxu0 0.0
  %84 = vmatprep.subr.mxu0 0.0
  %85 = vmatpush1.msra.mxu0 0.0
  %86 = vmatprep.subr.mxu0 0.0
  %87 = vmatpush1.msra.mxu0 0.0
  %88 = vmatprep.subr.mxu0 0.0
  %89 = vmatpush1.msra.mxu0 0.0
  %90 = vmatprep.subr.mxu0 0.0
  %91 = vmatpush1.msra.mxu0 0.0
  %92 = vmatprep.subr.mxu0 0.0
  %93 = vmatpush1.msra.mxu0 0.0
  %94 = vmatprep.subr.mxu0 0.0
  %95 = vmatpush1.msra.mxu0 0.0
  %96 = vmatprep.subr.mxu0 0.0
  %97 = vmatpush1.msra.mxu0 0.0
  %98 = vmatprep.subr.mxu0 0.0
  %99 = vmatpush1.msra.mxu0 0.0
  %100 = vmatprep.subr.mxu0 0.0
  %101 = vmatpush1.msra.mxu0 0.0
  %102 = vmatprep.subr.mxu0 0.0
  %103 = vmatpush1.msra.mxu0 0.0
  %104 = vmatprep.subr.mxu0 0.0
  %105 = vmatpush1.msra.mxu0 0.0
  %106 = vmatprep.subr.mxu0 0.0
  %107 = vmatpush1.msra.mxu0 0.0
  %108 = vmatprep.subr.mxu0 0.0
  %109 = vmatpush1.msra.mxu0 0.0
  %110 = vmatprep.subr.mxu0 0.0
  %111 = vmatpush1.msra.mxu0 0.0
  %112 = vmatprep.subr.mxu0 0.0
  %113 = vmatpush1.msra.mxu0 0.0
  %114 = vmatprep.subr.mxu0 0.0
  %115 = vmatpush1.msra.mxu0 0.0
  %116 = vmatprep.subr.mxu0 0.0
  %117 = vmatpush1.msra.mxu0 0.0
  %118 = vmatprep.subr.mxu0 0.0
  %119 = vmatpush1.msra.mxu0 0.0
  %120 = vmatprep.subr.mxu0 0.0
  %121 = vmatpush1.msra.mxu0 0.0
  %122 = vmatprep.subr.mxu0 0.0
  %123 = vmatpush1.msra.mxu0 0.0
  %124 = vmatprep.subr.mxu0 0.0
  %125 = vmatpush1.msra.mxu0 0.0
  %126 = vmatprep.subr.mxu0 0.0
  %127 = vmatpush1.msra.mxu0 0.0
  %128 = vmatprep.subr.mxu0 0.0
  %129 = vmatpush1.msra.mxu0 0.0
  %130 = vmatprep.subr.mxu0 0.0
  %131 = vmatpush1.msra.mxu0 0.0
  %132 = vmatprep.subr.mxu0 0.0
  %133 = vmatpush1.msra.mxu0 0.0
  %134 = vmatprep.subr.mxu0 0.0
  %135 = vmatpush1.msra.mxu0 0.0
  %136 = vmatprep.mubr.f32.mxu0 0.0
  %137 = vmatmul.mubr.f32.gmra.mrb[0].mxu0 %v54
  %v138 = vpop.f32.mrb[0].mxu0
  %v139 = vadd.f32 %v35, %v138
  %v140 = vpop.f32.mrb[0].mxu0
  %v141 = vadd.f32 %v39, %v140
  %142 = vmatprep.mubr.f32.mxu0 0.0
  %143 = vmatmul.mubr.f32.gmra.mrb[0].mxu0 %v57
  %v144 = vpop.f32.mrb[0].mxu0
  %v145 = vadd.f32 %v35, %v144
  %v146 = vpop.f32.mrb[0].mxu0
  %v147 = vadd.f32 %v39, %v146
  %148 = vdwg.mxu0
  %149 = vmatprep.subr.mxu0 %v25
  %150 = vmatpush1.msra.mxu0 %v24
  %151 = vmatprep.subr.mxu0 %v70
  %152 = vmatpush1.msra.mxu0 %v67
  %153 = vmatprep.subr.mxu0 0.0
  %154 = vmatpush1.msra.mxu0 0.0
  %155 = vmatprep.subr.mxu0 0.0
  %156 = vmatpush1.msra.mxu0 0.0
  %157 = vmatprep.subr.mxu0 0.0
  %158 = vmatpush1.msra.mxu0 0.0
  %159 = vmatprep.subr.mxu0 0.0
  %160 = vmatpush1.msra.mxu0 0.0
  %161 = vmatprep.subr.mxu0 0.0
  %162 = vmatpush1.msra.mxu0 0.0
  %163 = vmatprep.subr.mxu0 0.0
  %164 = vmatpush1.msra.mxu0 0.0
  %165 = vmatprep.subr.mxu0 0.0
  %166 = vmatpush1.msra.mxu0 0.0
  %167 = vmatprep.subr.mxu0 0.0
  %168 = vmatpush1.msra.mxu0 0.0
  %169 = vmatprep.subr.mxu0 0.0
  %170 = vmatpush1.msra.mxu0 0.0
  %171 = vmatprep.subr.mxu0 0.0
  %172 = vmatpush1.msra.mxu0 0.0
  %173 = vmatprep.subr.mxu0 0.0
  %174 = vmatpush1.msra.mxu0 0.0
  %175 = vmatprep.subr.mxu0 0.0
  %176 = vmatpush1.msra.mxu0 0.0
  %177 = vmatprep.subr.mxu0 0.0
  %178 = vmatpush1.msra.mxu0 0.0
  %179 = vmatprep.subr.mxu0 0.0
  %180 = vmatpush1.msra.mxu0 0.0
  %181 = vmatprep.subr.mxu0 0.0
  %182 = vmatpush1.msra.mxu0 0.0
  %183 = vmatprep.subr.mxu0 0.0
  %184 = vmatpush1.msra.mxu0 0.0
  %185 = vmatprep.subr.mxu0 0.0
  %186 = vmatpush1.msra.mxu0 0.0
  %187 = vmatprep.subr.mxu0 0.0
  %188 = vmatpush1.msra.mxu0 0.0
  %189 = vmatprep.subr.mxu0 0.0
  %190 = vmatpush1.msra.mxu0 0.0
  %191 = vmatprep.subr.mxu0 0.0
  %192 = vmatpush1.msra.mxu0 0.0
  %193 = vmatprep.subr.mxu0 0.0
  %194 = vmatpush1.msra.mxu0 0.0
  %195 = vmatprep.subr.mxu0 0.0
  %196 = vmatpush1.msra.mxu0 0.0
  %197 = vmatprep.subr.mxu0 0.0
  %198 = vmatpush1.msra.mxu0 0.0
  %199 = vmatprep.subr.mxu0 0.0
  %200 = vmatpush1.msra.mxu0 0.0
  %201 = vmatprep.subr.mxu0 0.0
  %202 = vmatpush1.msra.mxu0 0.0
  %203 = vmatprep.subr.mxu0 0.0
  %204 = vmatpush1.msra.mxu0 0.0
  %205 = vmatprep.subr.mxu0 0.0
  %206 = vmatpush1.msra.mxu0 0.0
  %207 = vmatprep.subr.mxu0 0.0
  %208 = vmatpush1.msra.mxu0 0.0
  %209 = vmatprep.subr.mxu0 0.0
  %210 = vmatpush1.msra.mxu0 0.0
  %211 = vmatprep.subr.mxu0 0.0
  %212 = vmatpush1.msra.mxu0 0.0
  %213 = vmatprep.mubr.f32.mxu0 0.0
  %214 = vmatmul.mubr.f32.gmra.mrb[0].mxu0 %v54
  %v215 = vpop.f32.mrb[0].mxu0
  %v216 = vadd.f32 %v43, %v215
  %v217 = vpop.f32.mrb[0].mxu0
  %v218 = vadd.f32 %v47, %v217
  %219 = vmatprep.mubr.f32.mxu0 0.0
  %220 = vmatmul.mubr.f32.gmra.mrb[0].mxu0 %v57
  %v221 = vpop.f32.mrb[0].mxu0
  %v222 = vadd.f32 %v43, %v221
  %v223 = vpop.f32.mrb[0].mxu0
  %v224 = vadd.f32 %v47, %v223
  %225 = vdwg.mxu0
  %v226 = vxor.u32 %v139, 2147483648
  %v227 = vxor.u32 %v141, 2147483648
  %v228 = vxor.u32 %v216, 2147483648
  %v229 = vxor.u32 %v218, 2147483648
  %v230 = vxor.u32 %v145, 2147483648
  %v231 = vxor.u32 %v147, 2147483648
  %v232 = vxor.u32 %v222, 2147483648
  %v233 = vxor.u32 %v224, 2147483648
  %v234 = vmul.f32 %v226, 1.442695
  %v235 = vpow.pop %v234
  %v236 = vmul.f32 %v227, 1.442695
  %v237 = vpow.pop %v236
  %v238 = vmul.f32 %v228, 1.442695
  %v239 = vpow.pop %v238
  %v240 = vmul.f32 %v229, 1.442695
  %v241 = vpow.pop %v240
  %v242 = vmul.f32 %v230, 1.442695
  %v243 = vpow.pop %v242
  %v244 = vmul.f32 %v231, 1.442695
  %v245 = vpow.pop %v244
  %v246 = vmul.f32 %v232, 1.442695
  %v247 = vpow.pop %v246
  %v248 = vmul.f32 %v233, 1.442695
  %v249 = vpow.pop %v248
  %v250 = vadd.f32 %v235, 1.0
  %v251 = vadd.f32 %v237, 1.0
  %v252 = vadd.f32 %v239, 1.0
  %v253 = vadd.f32 %v241, 1.0
  %v254 = vadd.f32 %v243, 1.0
  %v255 = vadd.f32 %v245, 1.0
  %v256 = vadd.f32 %v247, 1.0
  %v257 = vadd.f32 %v249, 1.0
  %v258 = vrcp.pop %v250
  %v259 = vmul.f32 1.0, %v258
  %v260 = vrcp.pop %v251
  %v261 = vmul.f32 1.0, %v260
  %v262 = vrcp.pop %v252
  %v263 = vmul.f32 1.0, %v262
  %v264 = vrcp.pop %v253
  %v265 = vmul.f32 1.0, %v264
  %v266 = vrcp.pop %v254
  %v267 = vmul.f32 1.0, %v266
  %v268 = vrcp.pop %v255
  %v269 = vmul.f32 1.0, %v268
  %v270 = vrcp.pop %v256
  %v271 = vmul.f32 1.0, %v270
  %v272 = vrcp.pop %v257
  %v273 = vmul.f32 1.0, %v272
  %v274 = vmul.f32 %v139, %v259
  %v275 = vmul.f32 %v141, %v261
  %v276 = vmul.f32 %v216, %v263
  %v277 = vmul.f32 %v218, %v265
  %v278 = vmul.f32 %v145, %v267
  %v279 = vmul.f32 %v147, %v269
  %v280 = vmul.f32 %v222, %v271
  %v281 = vmul.f32 %v224, %v273
  %v282 = vld [vmem:[%s3] sm:$0xff]
  %v283 = vld [vmem:[%s3 + $0x8] sm:$0xff]
  %v284 = vld [vmem:[%s3 + $0x10] sm:$0xff]
  %v285 = vld [vmem:[%s3 + $0x18] sm:$0xff]
  %v286 = vld [vmem:[%s3 + $0x20] sm:$0xff]
  %v287 = vld [vmem:[%s3 + $0x28] sm:$0xff]
  %v288 = vld [vmem:[%s3 + $0x30] sm:$0xff]
  %v289 = vld [vmem:[%s3 + $0x38] sm:$0xff]
  %v290 = vld [vmem:[%s3 + $0x40] sm:$0xff]
  %v291 = vld [vmem:[%s3 + $0x48] sm:$0xff]
  %v292 = vld [vmem:[%s3 + $0x50] sm:$0xff]
  %v293 = vld [vmem:[%s3 + $0x58] sm:$0xff]
  %v294 = vld [vmem:[%s3 + $0x60] sm:$0xff]
  %v295 = vld [vmem:[%s3 + $0x68] sm:$0xff]
  %v296 = vld [vmem:[%s3 + $0x70] sm:$0xff]
  %v297 = vld [vmem:[%s3 + $0x78] sm:$0xff]
  %v298 = vld [vmem:[%s3 + $0x80] sm:$0xff]
  %v299 = vld [vmem:[%s3 + $0x88] sm:$0xff]
  %v300 = vld [vmem:[%s3 + $0x90] sm:$0xff]
  %v301 = vld [vmem:[%s3 + $0x98] sm:$0xff]
  %v302 = vld [vmem:[%s3 + $0xa0] sm:$0xff]
  %v303 = vld [vmem:[%s3 + $0xa8] sm:$0xff]
  %v304 = vld [vmem:[%s3 + $0xb0] sm:$0xff]
  %v305 = vld [vmem:[%s3 + $0xb8] sm:$0xff]
  %v306 = vld [vmem:[%s3 + $0xc0] sm:$0xff]
  %v307 = vld [vmem:[%s3 + $0xc8] sm:$0xff]
  %v308 = vld [vmem:[%s3 + $0xd0] sm:$0xff]
  %v309 = vld [vmem:[%s3 + $0xd8] sm:$0xff]
  %v310 = vld [vmem:[%s3 + $0xe0] sm:$0xff]
  %v311 = vld [vmem:[%s3 + $0xe8] sm:$0xff]
  %v312 = vld [vmem:[%s3 + $0xf0] sm:$0xff]
  %v313 = vld [vmem:[%s3 + $0xf8] sm:$0xff]
  %v314 = vld [vmem:[%s3 + $0x100] sm:$0xff]
  %v315 = vld [vmem:[%s3 + $0x108] sm:$0xff]
  %v316 = vld [vmem:[%s3 + $0x110] sm:$0xff]
  %v317 = vld [vmem:[%s3 + $0x118] sm:$0xff]
  %v318 = vld [vmem:[%s3 + $0x120] sm:$0xff]
  %v319 = vld [vmem:[%s3 + $0x128] sm:$0xff]
  %v320 = vld [vmem:[%s3 + $0x130] sm:$0xff]
  %v321 = vld [vmem:[%s3 + $0x138] sm:$0xff]
  %v322 = vld [vmem:[%s3 + $0x140] sm:$0xff]
  %v323 = vld [vmem:[%s3 + $0x148] sm:$0xff]
  %v324 = vld [vmem:[%s3 + $0x150] sm:$0xff]
  %v325 = vld [vmem:[%s3 + $0x158] sm:$0xff]
  %v326 = vld [vmem:[%s3 + $0x160] sm:$0xff]
  %v327 = vld [vmem:[%s3 + $0x168] sm:$0xff]
  %v328 = vld [vmem:[%s3 + $0x170] sm:$0xff]
  %v329 = vld [vmem:[%s3 + $0x178] sm:$0xff]
  %v330 = vld [vmem:[%s3 + $0x180] sm:$0xff]
  %v331 = vld [vmem:[%s3 + $0x188] sm:$0xff]
  %v332 = vld [vmem:[%s3 + $0x190] sm:$0xff]
  %v333 = vld [vmem:[%s3 + $0x198] sm:$0xff]
  %v334 = vld [vmem:[%s3 + $0x1a0] sm:$0xff]
  %v335 = vld [vmem:[%s3 + $0x1a8] sm:$0xff]
  %v336 = vld [vmem:[%s3 + $0x1b0] sm:$0xff]
  %v337 = vld [vmem:[%s3 + $0x1b8] sm:$0xff]
  %v338 = vld [vmem:[%s3 + $0x1c0] sm:$0xff]
  %v339 = vld [vmem:[%s3 + $0x1c8] sm:$0xff]
  %v340 = vld [vmem:[%s3 + $0x1d0] sm:$0xff]
  %v341 = vld [vmem:[%s3 + $0x1d8] sm:$0xff]
  %v342 = vld [vmem:[%s3 + $0x1e0] sm:$0xff]
  %v343 = vld [vmem:[%s3 + $0x1e8] sm:$0xff]
  %v344 = vld [vmem:[%s3 + $0x1f0] sm:$0xff]
  %v345 = vld [vmem:[%s3 + $0x1f8] sm:$0xff]
  %v346 = vld [vmem:[%s4] sm:$0x1]
  %v348 = vlaneseq
  %v349 = vshrl.u32 %v348, 7
  %v350 = vsub.s32 0, %v349
  %v351 = vrot.slane %v346, %v350
  %353 = vmatprep.subr.mxu0 0.0
  %354 = vmatpush1.msra.mxu0 %v282
  %355 = vmatprep.subr.mxu0 0.0
  %356 = vmatpush1.msra.mxu0 %v283
  %357 = vmatprep.subr.mxu0 0.0
  %358 = vmatpush1.msra.mxu0 %v284
  %359 = vmatprep.subr.mxu0 0.0
  %360 = vmatpush1.msra.mxu0 %v285
  %361 = vmatprep.subr.mxu0 0.0
  %362 = vmatpush1.msra.mxu0 %v286
  %363 = vmatprep.subr.mxu0 0.0
  %364 = vmatpush1.msra.mxu0 %v287
  %365 = vmatprep.subr.mxu0 0.0
  %366 = vmatpush1.msra.mxu0 %v288
  %367 = vmatprep.subr.mxu0 0.0
  %368 = vmatpush1.msra.mxu0 %v289
  %369 = vmatprep.subr.mxu0 0.0
  %370 = vmatpush1.msra.mxu0 %v290
  %371 = vmatprep.subr.mxu0 0.0
  %372 = vmatpush1.msra.mxu0 %v291
  %373 = vmatprep.subr.mxu0 0.0
  %374 = vmatpush1.msra.mxu0 %v292
  %375 = vmatprep.subr.mxu0 0.0
  %376 = vmatpush1.msra.mxu0 %v293
  %377 = vmatprep.subr.mxu0 0.0
  %378 = vmatpush1.msra.mxu0 %v294
  %379 = vmatprep.subr.mxu0 0.0
  %380 = vmatpush1.msra.mxu0 %v295
  %381 = vmatprep.subr.mxu0 0.0
  %382 = vmatpush1.msra.mxu0 %v296
  %383 = vmatprep.subr.mxu0 0.0
  %384 = vmatpush1.msra.mxu0 %v297
  %385 = vmatprep.subr.mxu0 0.0
  %386 = vmatpush1.msra.mxu0 %v298
  %387 = vmatprep.subr.mxu0 0.0
  %388 = vmatpush1.msra.mxu0 %v299
  %389 = vmatprep.subr.mxu0 0.0
  %390 = vmatpush1.msra.mxu0 %v300
  %391 = vmatprep.subr.mxu0 0.0
  %392 = vmatpush1.msra.mxu0 %v301
  %393 = vmatprep.subr.mxu0 0.0
  %394 = vmatpush1.msra.mxu0 %v302
  %395 = vmatprep.subr.mxu0 0.0
  %396 = vmatpush1.msra.mxu0 %v303
  %397 = vmatprep.subr.mxu0 0.0
  %398 = vmatpush1.msra.mxu0 %v304
  %399 = vmatprep.subr.mxu0 0.0
  %400 = vmatpush1.msra.mxu0 %v305
  %401 = vmatprep.subr.mxu0 0.0
  %402 = vmatpush1.msra.mxu0 %v306
  %403 = vmatprep.subr.mxu0 0.0
  %404 = vmatpush1.msra.mxu0 %v307
  %405 = vmatprep.subr.mxu0 0.0
  %406 = vmatpush1.msra.mxu0 %v308
  %407 = vmatprep.subr.mxu0 0.0
  %408 = vmatpush1.msra.mxu0 %v309
  %409 = vmatprep.subr.mxu0 0.0
  %410 = vmatpush1.msra.mxu0 %v310
  %411 = vmatprep.subr.mxu0 0.0
  %412 = vmatpush1.msra.mxu0 %v311
  %413 = vmatprep.subr.mxu0 0.0
  %414 = vmatpush1.msra.mxu0 %v312
  %415 = vmatprep.subr.mxu0 0.0
  %416 = vmatpush1.msra.mxu0 %v313
  %417 = vmatprep.mubr.f32.mxu0 %v275
  %418 = vmatmul.mubr.f32.gmra.mrb[0].mxu0 %v274
  %v419 = vpop.f32.mrb[0].mxu0
  %v420 = vadd.f32 %v351, %v419
  %v421 = vpop.f32.mrb[0].mxu0
  %422 = vmatprep.mubr.f32.mxu0 %v279
  %423 = vmatmul.mubr.f32.gmra.mrb[0].mxu0 %v278
  %v424 = vpop.f32.mrb[0].mxu0
  %v425 = vadd.f32 %v351, %v424
  %v426 = vpop.f32.mrb[0].mxu0
  %427 = vdwg.mxu0
  %428 = vmatprep.subr.mxu0 0.0
  %429 = vmatpush1.msra.mxu0 %v314
  %430 = vmatprep.subr.mxu0 0.0
  %431 = vmatpush1.msra.mxu0 %v315
  %432 = vmatprep.subr.mxu0 0.0
  %433 = vmatpush1.msra.mxu0 %v316
  %434 = vmatprep.subr.mxu0 0.0
  %435 = vmatpush1.msra.mxu0 %v317
  %436 = vmatprep.subr.mxu0 0.0
  %437 = vmatpush1.msra.mxu0 %v318
  %438 = vmatprep.subr.mxu0 0.0
  %439 = vmatpush1.msra.mxu0 %v319
  %440 = vmatprep.subr.mxu0 0.0
  %441 = vmatpush1.msra.mxu0 %v320
  %442 = vmatprep.subr.mxu0 0.0
  %443 = vmatpush1.msra.mxu0 %v321
  %444 = vmatprep.subr.mxu0 0.0
  %445 = vmatpush1.msra.mxu0 %v322
  %446 = vmatprep.subr.mxu0 0.0
  %447 = vmatpush1.msra.mxu0 %v323
  %448 = vmatprep.subr.mxu0 0.0
  %449 = vmatpush1.msra.mxu0 %v324
  %450 = vmatprep.subr.mxu0 0.0
  %451 = vmatpush1.msra.mxu0 %v325
  %452 = vmatprep.subr.mxu0 0.0
  %453 = vmatpush1.msra.mxu0 %v326
  %454 = vmatprep.subr.mxu0 0.0
  %455 = vmatpush1.msra.mxu0 %v327
  %456 = vmatprep.subr.mxu0 0.0
  %457 = vmatpush1.msra.mxu0 %v328
  %458 = vmatprep.subr.mxu0 0.0
  %459 = vmatpush1.msra.mxu0 %v329
  %460 = vmatprep.subr.mxu0 0.0
  %461 = vmatpush1.msra.mxu0 %v330
  %462 = vmatprep.subr.mxu0 0.0
  %463 = vmatpush1.msra.mxu0 %v331
  %464 = vmatprep.subr.mxu0 0.0
  %465 = vmatpush1.msra.mxu0 %v332
  %466 = vmatprep.subr.mxu0 0.0
  %467 = vmatpush1.msra.mxu0 %v333
  %468 = vmatprep.subr.mxu0 0.0
  %469 = vmatpush1.msra.mxu0 %v334
  %470 = vmatprep.subr.mxu0 0.0
  %471 = vmatpush1.msra.mxu0 %v335
  %472 = vmatprep.subr.mxu0 0.0
  %473 = vmatpush1.msra.mxu0 %v336
  %474 = vmatprep.subr.mxu0 0.0
  %475 = vmatpush1.msra.mxu0 %v337
  %476 = vmatprep.subr.mxu0 0.0
  %477 = vmatpush1.msra.mxu0 %v338
  %478 = vmatprep.subr.mxu0 0.0
  %479 = vmatpush1.msra.mxu0 %v339
  %480 = vmatprep.subr.mxu0 0.0
  %481 = vmatpush1.msra.mxu0 %v340
  %482 = vmatprep.subr.mxu0 0.0
  %483 = vmatpush1.msra.mxu0 %v341
  %484 = vmatprep.subr.mxu0 0.0
  %485 = vmatpush1.msra.mxu0 %v342
  %486 = vmatprep.subr.mxu0 0.0
  %487 = vmatpush1.msra.mxu0 %v343
  %488 = vmatprep.subr.mxu0 0.0
  %489 = vmatpush1.msra.mxu0 %v344
  %490 = vmatprep.subr.mxu0 0.0
  %491 = vmatpush1.msra.mxu0 %v345
  %492 = vmatprep.mubr.f32.mxu0 %v277
  %493 = vmatmul.mubr.f32.gmra.mrb[0].mxu0 %v276
  %v494 = vpop.f32.mrb[0].mxu0
  %v495 = vadd.f32 %v420, %v494
  %v496 = vpop.f32.mrb[0].mxu0
  %497 = vmatprep.mubr.f32.mxu0 %v281
  %498 = vmatmul.mubr.f32.gmra.mrb[0].mxu0 %v280
  %v499 = vpop.f32.mrb[0].mxu0
  %v500 = vadd.f32 %v425, %v499
  %v501 = vpop.f32.mrb[0].mxu0
  %502 = vdwg.mxu0
  %503 = vst.msk [vmem:[%s5] sm:$0xff] %vm52, %v495
  %504 = vst.msk [vmem:[%s5 + $0x8] sm:$0xff] %vm52, %v500
  // Predicated region
  $region22: #{tpu_custom_call.1} parent=0 // pred_check
    _
  $region23: #{tpu_custom_call.1} parent=0 // pred_check_branch
    %506 = sbr.rel (0) target = $region25
  $region24: #{tpu_custom_call.1} parent=0 // pred_region
    _
  $region25: #{tpu_custom_call.1} parent=0 // pred_fallthru
    _
  // Predicated region
  $region26: #{tpu_custom_call.1} parent=0 // pred_check
    _
  $region27: #{tpu_custom_call.1} parent=0 // pred_check_branch
    %508 = sbr.rel (0) target = $region29
  $region28: #{tpu_custom_call.1} parent=0 // pred_region
    _
  $region29: #{tpu_custom_call.1} parent=0 // pred_fallthru
    _

</llo_original>
